<compile_context>
chip_gen: v5e
topology: v5e:2x2
jax: 0.10.0
libtpu: 0.0.40
codegen_flags: <defaults>
</compile_context>

<pallas_src>
import functools

import jax
import jax.numpy as jnp
from jax.experimental import pallas as pl
from jax.experimental.pallas import tpu as pltpu


# ----------------------------------------------------------------------------
# kernel 1: per-row cosine distance (streaming, parallel over batch tiles)
# ----------------------------------------------------------------------------
def _ocl_distance_kernel(a_ref, b_ref, d_ref):
    a = a_ref[...].astype(jnp.float32)                    # (TB, D)
    b = b_ref[...].astype(jnp.float32)                    # (TB, D)

    dot = jnp.sum(a * b, axis=-1, keepdims=True)          # (TB, 1)
    saa = jnp.sum(a * a, axis=-1, keepdims=True)
    sbb = jnp.sum(b * b, axis=-1, keepdims=True)
    # torch cosine_similarity: cos = dot / (max(|a|, eps) * max(|b|, eps)),
    # eps = 1e-8.  sqrt/clamp are monotone, so clamping the *squared* norms at
    # eps^2 is equivalent, and rsqrt runs on the EUP (its own VLIW slot)
    # instead of sqrt+divide on the VALU.
    eps2 = jnp.float32(1e-16)
    cos = dot * jax.lax.rsqrt(jnp.maximum(saa, eps2) * jnp.maximum(sbb, eps2))
    # TODO(synk): on v7x with bf16 inputs the VPU can approach slot saturation;
    # if profiling shows that, push the D-axis reductions onto the idle MXU
    # (e.g. prod @ ones((D, 128))) and keep only the products on the VPU.
    d_ref[...] = 1.0 - cos                                 # (TB, 1)


# ----------------------------------------------------------------------------
# kernel 2: global hard-pair mining + loss over lane-dense distances/labels
# ----------------------------------------------------------------------------
def _ocl_finalize_kernel(d_ref, lab_ref, out_ref, *, margin):
    d = d_ref[...]            # (b_pad/128, 128) f32 cosine distances
    lab = lab_ref[...]        # (b_pad/128, 128) f32 in {-1 (pad/junk), 0, 1}
    pos_mask = lab == 1.0
    neg_mask = lab == 0.0

    big = jnp.float32(1e30)   # safe sentinel: cosine distance is O(1);
                              # junk/NaN rows are masked out *before* reducing.
    pos_cnt = jnp.sum(pos_mask.astype(jnp.float32))
    neg_cnt = jnp.sum(neg_mask.astype(jnp.float32))

    poss_max = jnp.max(jnp.where(pos_mask, d, -big))
    negs_min = jnp.min(jnp.where(neg_mask, d, big))
    poss_mean = jnp.sum(jnp.where(pos_mask, d, 0.0)) / jnp.maximum(pos_cnt, 1.0)
    negs_mean = jnp.sum(jnp.where(neg_mask, d, 0.0)) / jnp.maximum(neg_cnt, 1.0)

    # negs[negs < (poss.max() if len(poss) > 1 else negs.mean())]
    neg_thr = jnp.where(pos_cnt > 1.0, poss_max, negs_mean)
    # poss[poss > (negs.min() if len(negs) > 1 else poss.mean())]
    pos_thr = jnp.where(neg_cnt > 1.0, negs_min, poss_mean)

    sel_pos = pos_mask & (d > pos_thr)
    sel_neg = neg_mask & (d < neg_thr)

    pos_loss = jnp.sum(jnp.where(sel_pos, d * d, 0.0))
    hinge = jnp.maximum(jnp.float32(margin) - d, 0.0)
    neg_loss = jnp.sum(jnp.where(sel_neg, hinge * hinge, 0.0))
    out_ref[0, 0] = pos_loss + neg_loss


# ----------------------------------------------------------------------------
# sizing heuristics
# ----------------------------------------------------------------------------
def _default_vmem_limit_bytes():
    # Generation-aware: 64 MiB physical VMEM on v7x vs 128 MiB on v5e/v6e; the
    # scoped defaults (16/32 MiB) are too small for large tiles.
    try:
        phys = int(pltpu.get_tpu_info().vmem_capacity_bytes)
        if phys <= 0:
            raise ValueError
    except Exception:
        phys = 64 * 1024 * 1024  # conservative (v7x) fallback
    return max(32 * 1024 * 1024, min((phys * 7) // 10, 96 * 1024 * 1024))


def _pick_tile_rows(hidden, itemsize, vmem_limit_bytes):
    # VMEM cost per row, per pipeline stage:
    #   2 streamed embedding inputs * hidden * itemsize
    #   + 512 B for the lane-padded (rows, 1) f32 distance output block.
    per_row = 2 * hidden * itemsize + 512
    budget = (vmem_limit_bytes * 7) // 10          # headroom for compiler scratch
    tb = budget // (2 * per_row)                   # 2 pipeline buffers per operand
    # Bytes-per-step target instead of a hard row cap: keep each streamed
    # (TB, D) block <= ~16 MiB (returns flatten out past that); the VMEM
    # budget above already lets blocks reach >= ~8 MiB so the ~0.35 us fixed
    # per-step cost stays small even at v7x HBM bandwidth.
    cap_rows = (16 * 1024 * 1024) // max(1, hidden * itemsize)
    tb = min(tb, cap_rows)
    return max(128, (tb // 128) * 128)


_PAD_SMALL_BATCH = 1024  # below this, padding the embeddings costs ~nothing


# ----------------------------------------------------------------------------
# wrapper
# ----------------------------------------------------------------------------
def online_contrastive_loss(emb_a, emb_b, labels, margin=0.5,
                            tile_rows=None, vmem_limit_bytes=None):
    """emb_a, emb_b: (B, D) f32/bf16 sentence embeddings; labels: (B,) in {0,1}.

    Returns the scalar OnlineContrastiveLoss (size_average=False semantics).
    Feed bf16 embeddings when available: the distance kernel is HBM-bandwidth
    bound and upcasts to f32 in-register.
    """
    B, D = emb_a.shape
    assert emb_b.shape == (B, D)
    itemsize = jnp.dtype(emb_a.dtype).itemsize

    if vmem_limit_bytes is None:
        vmem_limit_bytes = _default_vmem_limit_bytes()
    if tile_rows is None:
        tile_rows = _pick_tile_rows(D, itemsize, vmem_limit_bytes)
    tile_rows = max(128, (int(tile_rows) // 128) * 128)

    # Small batches: pad the embeddings up to the 128-row granularity (the
    # copy is negligible).  Large batches: never copy the (B, D) embeddings --
    # clamp the tile so every block *starts* in-bounds and let Pallas handle
    # the ragged last block; its junk rows land in label slots set to -1.
    pad_embeddings = B < _PAD_SMALL_BATCH
    cover = ((B + 127) // 128) * 128 if pad_embeddings else B
    if pad_embeddings:
        tile_rows = min(tile_rows, cover)
    else:
        tile_rows = min(tile_rows, (B // 128) * 128)
    n_tiles = -(-cover // tile_rows)
    # Re-balance the tile so the last (padded / ragged) block wastes little.
    tile_rows = ((-(-cover // n_tiles) + 127) // 128) * 128
    n_tiles = -(-cover // tile_rows)
    b_pad = n_tiles * tile_rows

    if pad_embeddings and b_pad != B:
        pad = b_pad - B
        emb_a = jnp.concatenate([emb_a, jnp.zeros((pad, D), emb_a.dtype)], axis=0)
        emb_b = jnp.concatenate([emb_b, jnp.zeros((pad, D), emb_b.dtype)], axis=0)

    # label = -1 marks padded / out-of-range rows -> excluded everywhere.
    # (O(B) work, unlike padding the (B, D) embeddings.)
    labels_f = jnp.full((b_pad,), -1.0, jnp.float32)
    labels_f = labels_f.at[:B].set(labels.astype(jnp.float32))
    labels_dense = labels_f.reshape(b_pad // 128, 128)

    rows_in = emb_a.shape[0]
    dist_cost = pl.CostEstimate(
        flops=8 * b_pad * D + 8 * b_pad,
        transcendentals=b_pad,                       # one rsqrt per row
        bytes_accessed=2 * rows_in * D * itemsize + b_pad * 4,
    )

    d_col = pl.pallas_call(
        _ocl_distance_kernel,
        out_shape=jax.ShapeDtypeStruct((b_pad, 1), jnp.float32),
        grid_spec=pltpu.PrefetchScalarGridSpec(
            num_scalar_prefetch=0,
            grid=(n_tiles,),
            in_specs=[
                pl.BlockSpec((tile_rows, D), lambda i: (i, 0)),
                pl.BlockSpec((tile_rows, D), lambda i: (i, 0)),
            ],
            # (tile_rows, 1) store is lane-sparse, but output traffic is only
            # 1/(2D) of the input traffic; the lane-dense relayout for the
            # finalize pass is done as a free HBM-side reshape below instead
            # of an in-kernel sublane->lane reshape.
            out_specs=pl.BlockSpec((tile_rows, 1), lambda i: (i, 0)),
            # TODO(synk): sweep pipeline_mode=pl.Buffered(3) on the two
            # embedding specs if xprof shows exposed DMA between steps on v7x.
        ),
        compiler_params=pltpu.CompilerParams(
            # Blocks are independent -> shard the stream across both
            # TensorCores on v7x (2x HBM bandwidth); no-op on v5e/v6e.
            dimension_semantics=("parallel",),
            vmem_limit_bytes=int(vmem_limit_bytes),
        ),
        cost_estimate=dist_cost,
    )(emb_a, emb_b)

    # Free, contiguous HBM-side relayout to a lane-dense (b_pad/128, 128) view:
    # the finalize kernel then loads full-width vregs (128x fewer VMEM rows).
    g = b_pad // 128
    d_dense = d_col.reshape(g, 128)

    fin_cost = pl.CostEstimate(
        flops=32 * b_pad, transcendentals=0, bytes_accessed=8 * b_pad + 4)

    out = pl.pallas_call(
        functools.partial(_ocl_finalize_kernel, margin=float(margin)),
        out_shape=jax.ShapeDtypeStruct((1, 1), jnp.float32),
        grid_spec=pltpu.PrefetchScalarGridSpec(
            num_scalar_prefetch=0,
            grid=(1,),
            in_specs=[
                pl.BlockSpec((g, 128), lambda i: (0, 0)),
                pl.BlockSpec((g, 128), lambda i: (0, 0)),
            ],
            out_specs=pl.BlockSpec((1, 1), lambda i: (0, 0)),
        ),
        compiler_params=pltpu.CompilerParams(
            dimension_semantics=("arbitrary",),
            vmem_limit_bytes=int(vmem_limit_bytes),
        ),
        cost_estimate=fin_cost,
    )(d_dense, labels_dense)
    return out[0, 0]


# ----------------------------------------------------------------------------
# pure-JAX reference (mirrors the torch module)
# ----------------------------------------------------------------------------
def _reference(emb_a, emb_b, labels, margin=0.5):
    a = emb_a.astype(jnp.float32)
    b = emb_b.astype(jnp.float32)
    eps = 1e-8
    cos = jnp.sum(a * b, -1) / (
        jnp.maximum(jnp.linalg.norm(a, axis=-1), eps)
        * jnp.maximum(jnp.linalg.norm(b, axis=-1), eps)
    )
    d = 1.0 - cos
    pos_mask = labels == 1
    neg_mask = labels == 0
    pos_cnt = jnp.sum(pos_mask)
    neg_cnt = jnp.sum(neg_mask)
    poss_max = jnp.max(jnp.where(pos_mask, d, -jnp.inf))
    negs_min = jnp.min(jnp.where(neg_mask, d, jnp.inf))
    poss_mean = jnp.sum(jnp.where(pos_mask, d, 0.0)) / jnp.maximum(pos_cnt, 1)
    negs_mean = jnp.sum(jnp.where(neg_mask, d, 0.0)) / jnp.maximum(neg_cnt, 1)
    neg_thr = jnp.where(pos_cnt > 1, poss_max, negs_mean)
    pos_thr = jnp.where(neg_cnt > 1, negs_min, poss_mean)
    sel_pos = pos_mask & (d > pos_thr)
    sel_neg = neg_mask & (d < neg_thr)
    pos_loss = jnp.sum(jnp.where(sel_pos, d * d, 0.0))
    neg_loss = jnp.sum(jnp.where(sel_neg, jnp.maximum(margin - d, 0.0) ** 2, 0.0))
    return pos_loss + neg_loss


if __name__ == "__main__":
    root = jax.random.PRNGKey(0)

    cases = [
        # (name, B, D, dtype, forced tile_rows)
        ("small_single_tile", 8, 32, jnp.float32, None),     # padded to 128
        ("multi_tile_padded", 300, 64, jnp.float32, 128),    # 3 tiles, padded
        ("ragged_no_pad",    1300, 64, jnp.float32, 256),    # no embedding copy
        ("bf16_inputs",       256, 128, jnp.bfloat16, None),
    ]
    for idx, (name, B, D, dtype, tr) in enumerate(cases):
        ka, kb, kl = jax.random.split(jax.random.fold_in(root, idx), 3)
        a = jax.random.normal(ka, (B, D), dtype=jnp.float32).astype(dtype)
        b = jax.random.normal(kb, (B, D), dtype=jnp.float32).astype(dtype)
        lab = jax.random.bernoulli(kl, 0.5, (B,)).astype(jnp.int32)

        loss = jax.block_until_ready(
            online_contrastive_loss(a, b, lab, margin=0.5, tile_rows=tr))
        ref = _reference(a, b, lab, margin=0.5)

        if dtype == jnp.float32:
            ok = jnp.allclose(loss, ref, rtol=1e-4, atol=1e-5)
        else:
            ok = jnp.allclose(loss, ref, rtol=5e-3, atol=1e-3)
        assert ok, (name, loss, ref)

    print("KERNEL_OK")
</pallas_src>

<mosaic_0001>
module attributes {stable_mosaic.version = 11 : i64} {
  func.func @_ocl_distance_kernel(%arg0: i32, %arg1: memref<128x32xf32, #tpu.memory_space<vmem>>, %arg2: memref<128x32xf32, #tpu.memory_space<vmem>>, %arg3: memref<128x1xf32, #tpu.memory_space<vmem>>) attributes {dimension_semantics = [#tpu.dimension_semantics<parallel>], iteration_bounds = array<i64: 1>, scalar_prefetch = 0 : i64, scratch_operands = 0 : i64, tpu.core_type = #tpu.core_type<tc>, window_params = [{transform_indices = @transform_0, window_bounds = array<i64: 128, 32>}, {transform_indices = @transform_1, window_bounds = array<i64: 128, 32>}, {transform_indices = @transform_2, window_bounds = array<i64: 128, 1>}]} {
    %c0 = arith.constant 0 : index
    %c0_0 = arith.constant 0 : index
    %0 = vector.load %arg1[%c0, %c0_0] : memref<128x32xf32, #tpu.memory_space<vmem>>, vector<128x32xf32>
    %c0_1 = arith.constant 0 : index
    %c0_2 = arith.constant 0 : index
    %1 = vector.load %arg2[%c0_1, %c0_2] : memref<128x32xf32, #tpu.memory_space<vmem>>, vector<128x32xf32>
    %2 = arith.mulf %0, %1 : vector<128x32xf32>
    %cst = arith.constant dense<0.000000e+00> : vector<128xf32>
    %3 = vector.multi_reduction <add>, %2, %cst [1] : vector<128x32xf32> to vector<128xf32>
    %4 = vector.shape_cast %3 : vector<128xf32> to vector<128x1xf32>
    %5 = arith.mulf %0, %0 : vector<128x32xf32>
    %cst_3 = arith.constant dense<0.000000e+00> : vector<128xf32>
    %6 = vector.multi_reduction <add>, %5, %cst_3 [1] : vector<128x32xf32> to vector<128xf32>
    %7 = vector.shape_cast %6 : vector<128xf32> to vector<128x1xf32>
    %8 = arith.mulf %1, %1 : vector<128x32xf32>
    %cst_4 = arith.constant dense<0.000000e+00> : vector<128xf32>
    %9 = vector.multi_reduction <add>, %8, %cst_4 [1] : vector<128x32xf32> to vector<128xf32>
    %10 = vector.shape_cast %9 : vector<128xf32> to vector<128x1xf32>
    %cst_5 = arith.constant 1.000000e-16 : f32
    %11 = vector.broadcast %cst_5 : f32 to vector<128x1xf32>
    %12 = arith.maximumf %7, %11 : vector<128x1xf32>
    %cst_6 = arith.constant 1.000000e-16 : f32
    %13 = vector.broadcast %cst_6 : f32 to vector<128x1xf32>
    %14 = arith.maximumf %10, %13 : vector<128x1xf32>
    %15 = arith.mulf %12, %14 : vector<128x1xf32>
    %16 = math.rsqrt %15 : vector<128x1xf32>
    %17 = arith.mulf %4, %16 : vector<128x1xf32>
    %cst_7 = arith.constant 1.000000e+00 : f32
    %18 = vector.broadcast %cst_7 : f32 to vector<128x1xf32>
    %19 = arith.subf %18, %17 : vector<128x1xf32>
    %c0_8 = arith.constant 0 : index
    %c0_9 = arith.constant 0 : index
    %20 = vector.load %arg3[%c0_8, %c0_9] : memref<128x1xf32, #tpu.memory_space<vmem>>, vector<128x1xf32>
    tpu.vector_store %arg3[%c0_8, %c0_9], %19 {strides = array<i32>} : memref<128x1xf32, #tpu.memory_space<vmem>>, vector<128x1xf32>,
    return
  }
  func.func @transform_0(%arg0: i32) -> (i32, i32) {
    %c0_i32 = arith.constant 0 : i32
    %c0_i32_0 = arith.constant 0 : i32
    return %arg0, %c0_i32 : i32, i32
  }
  func.func @transform_1(%arg0: i32) -> (i32, i32) {
    %c0_i32 = arith.constant 0 : i32
    %c0_i32_0 = arith.constant 0 : i32
    return %arg0, %c0_i32 : i32, i32
  }
  func.func @transform_2(%arg0: i32) -> (i32, i32) {
    %c0_i32 = arith.constant 0 : i32
    %c0_i32_0 = arith.constant 0 : i32
    return %arg0, %c0_i32 : i32, i32
  }
}

</mosaic_0001>

<llo_original>
// kernel: tpu_custom_call.1
$region0: #{tpu_custom_call.1}
  #allocation0 [shape = 'u32[]', space=smem, size = 0x4, offset = 0x4, fixed_abs, tag = 'smem constant byte address 0x4 - core index']
  #allocation1 [shape = 'u32[72,128]{1,0:T(1,128)}', space=vmem, size = 0x9000, scoped, tag = 'internal scratch']
  %s0 = inlined_call_operand.vmem [shape: f32[128,32], index: 0, kind: input, shape index: {}]
  %s1 = inlined_call_operand.vmem [shape: f32[128,32], index: 1, kind: input, shape index: {}]
  %s2 = inlined_call_operand.vmem [shape: f32[128,1], index: 2, kind: output, shape index: {}]
  %s3 = sld [smem:[#allocation0]]
  $region18: #{tpu_custom_call.1} parent=0
    _
  %s5 = ssub.s32 1, %s3
  %s6 = scalar_select 0, %s5, %s3
  // Predicated region
  $region2: #{tpu_custom_call.1} parent=0 // pred_check
    _
  $region3: #{tpu_custom_call.1} parent=0 // pred_check_branch
    %8 = sbr.rel (0) target = $region5
  $region4: #{tpu_custom_call.1} parent=0 // pred_region
    _
  $region5: #{tpu_custom_call.1} parent=0 // pred_fallthru
    _
  // Predicated region
  $region6: #{tpu_custom_call.1} parent=0 // pred_check
    _
  $region7: #{tpu_custom_call.1} parent=0 // pred_check_branch
    %10 = sbr.rel (0) target = $region9
  $region8: #{tpu_custom_call.1} parent=0 // pred_region
    _
  $region9: #{tpu_custom_call.1} parent=0 // pred_fallthru
    _
  %v11 = vld [vmem:[%s0] sm:$0xff]
  %v12 = vld [vmem:[%s0 + $0x8] sm:$0xff]
  %v13 = vld [vmem:[%s0 + $0x10] sm:$0xff]
  %v14 = vld [vmem:[%s0 + $0x18] sm:$0xff]
  %v15 = vld [vmem:[%s0 + $0x20] sm:$0xff]
  %v16 = vld [vmem:[%s0 + $0x28] sm:$0xff]
  %v17 = vld [vmem:[%s0 + $0x30] sm:$0xff]
  %v18 = vld [vmem:[%s0 + $0x38] sm:$0xff]
  %v19 = vld [vmem:[%s0 + $0x40] sm:$0xff]
  %v20 = vld [vmem:[%s0 + $0x48] sm:$0xff]
  %v21 = vld [vmem:[%s0 + $0x50] sm:$0xff]
  %v22 = vld [vmem:[%s0 + $0x58] sm:$0xff]
  %v23 = vld [vmem:[%s0 + $0x60] sm:$0xff]
  %v24 = vld [vmem:[%s0 + $0x68] sm:$0xff]
  %v25 = vld [vmem:[%s0 + $0x70] sm:$0xff]
  %v26 = vld [vmem:[%s0 + $0x78] sm:$0xff]
  %v27 = vld [vmem:[%s1] sm:$0xff]
  %v28 = vld [vmem:[%s1 + $0x8] sm:$0xff]
  %v29 = vld [vmem:[%s1 + $0x10] sm:$0xff]
  %v30 = vld [vmem:[%s1 + $0x18] sm:$0xff]
  %v31 = vld [vmem:[%s1 + $0x20] sm:$0xff]
  %v32 = vld [vmem:[%s1 + $0x28] sm:$0xff]
  %v33 = vld [vmem:[%s1 + $0x30] sm:$0xff]
  %v34 = vld [vmem:[%s1 + $0x38] sm:$0xff]
  %v35 = vld [vmem:[%s1 + $0x40] sm:$0xff]
  %v36 = vld [vmem:[%s1 + $0x48] sm:$0xff]
  %v37 = vld [vmem:[%s1 + $0x50] sm:$0xff]
  %v38 = vld [vmem:[%s1 + $0x58] sm:$0xff]
  %v39 = vld [vmem:[%s1 + $0x60] sm:$0xff]
  %v40 = vld [vmem:[%s1 + $0x68] sm:$0xff]
  %v41 = vld [vmem:[%s1 + $0x70] sm:$0xff]
  %v42 = vld [vmem:[%s1 + $0x78] sm:$0xff]
  %v43 = vmul.f32 %v11, %v27
  %v44 = vmul.f32 %v12, %v28
  %v45 = vmul.f32 %v13, %v29
  %v46 = vmul.f32 %v14, %v30
  %v47 = vmul.f32 %v15, %v31
  %v48 = vmul.f32 %v16, %v32
  %v49 = vmul.f32 %v17, %v33
  %v50 = vmul.f32 %v18, %v34
  %v51 = vmul.f32 %v19, %v35
  %v52 = vmul.f32 %v20, %v36
  %v53 = vmul.f32 %v21, %v37
  %v54 = vmul.f32 %v22, %v38
  %v55 = vmul.f32 %v23, %v39
  %v56 = vmul.f32 %v24, %v40
  %v57 = vmul.f32 %v25, %v41
  %v58 = vmul.f32 %v26, %v42
  %vm59 = vcmask 261120
  %v60 = vsel %vm59, %v43, 0.0
  %61 = vadd.xlane.f32.xlu0 %v60
  %v62 = vpop.xlane.xlu0 %61
  %v63 = vsel %vm59, %v44, 0.0
  %64 = vadd.xlane.f32.xlu0 %v63
  %v65 = vpop.xlane.xlu0 %64
  %v66 = vsel %vm59, %v45, 0.0
  %67 = vadd.xlane.f32.xlu0 %v66
  %v68 = vpop.xlane.xlu0 %67
  %v69 = vsel %vm59, %v46, 0.0
  %70 = vadd.xlane.f32.xlu0 %v69
  %v71 = vpop.xlane.xlu0 %70
  %v72 = vsel %vm59, %v47, 0.0
  %73 = vadd.xlane.f32.xlu0 %v72
  %v74 = vpop.xlane.xlu0 %73
  %v75 = vsel %vm59, %v48, 0.0
  %76 = vadd.xlane.f32.xlu0 %v75
  %v77 = vpop.xlane.xlu0 %76
  %v78 = vsel %vm59, %v49, 0.0
  %79 = vadd.xlane.f32.xlu0 %v78
  %v80 = vpop.xlane.xlu0 %79
  %v81 = vsel %vm59, %v50, 0.0
  %82 = vadd.xlane.f32.xlu0 %v81
  %v83 = vpop.xlane.xlu0 %82
  %v84 = vsel %vm59, %v51, 0.0
  %85 = vadd.xlane.f32.xlu0 %v84
  %v86 = vpop.xlane.xlu0 %85
  %v87 = vsel %vm59, %v52, 0.0
  %88 = vadd.xlane.f32.xlu0 %v87
  %v89 = vpop.xlane.xlu0 %88
  %v90 = vsel %vm59, %v53, 0.0
  %91 = vadd.xlane.f32.xlu0 %v90
  %v92 = vpop.xlane.xlu0 %91
  %v93 = vsel %vm59, %v54, 0.0
  %94 = vadd.xlane.f32.xlu0 %v93
  %v95 = vpop.xlane.xlu0 %94
  %v96 = vsel %vm59, %v55, 0.0
  %97 = vadd.xlane.f32.xlu0 %v96
  %v98 = vpop.xlane.xlu0 %97
  %v99 = vsel %vm59, %v56, 0.0
  %100 = vadd.xlane.f32.xlu0 %v99
  %v101 = vpop.xlane.xlu0 %100
  %v102 = vsel %vm59, %v57, 0.0
  %103 = vadd.xlane.f32.xlu0 %v102
  %v104 = vpop.xlane.xlu0 %103
  %v105 = vsel %vm59, %v58, 0.0
  %106 = vadd.xlane.f32.xlu0 %v105
  %v107 = vpop.xlane.xlu0 %106
  %v108 = vmul.f32 %v11, %v11
  %v109 = vmul.f32 %v12, %v12
  %v110 = vmul.f32 %v13, %v13
  %v111 = vmul.f32 %v14, %v14
  %v112 = vmul.f32 %v15, %v15
  %v113 = vmul.f32 %v16, %v16
  %v114 = vmul.f32 %v17, %v17
  %v115 = vmul.f32 %v18, %v18
  %v116 = vmul.f32 %v19, %v19
  %v117 = vmul.f32 %v20, %v20
  %v118 = vmul.f32 %v21, %v21
  %v119 = vmul.f32 %v22, %v22
  %v120 = vmul.f32 %v23, %v23
  %v121 = vmul.f32 %v24, %v24
  %v122 = vmul.f32 %v25, %v25
  %v123 = vmul.f32 %v26, %v26
  %v124 = vsel %vm59, %v108, 0.0
  %125 = vadd.xlane.f32.xlu0 %v124
  %v126 = vpop.xlane.xlu0 %125
  %v127 = vsel %vm59, %v109, 0.0
  %128 = vadd.xlane.f32.xlu0 %v127
  %v129 = vpop.xlane.xlu0 %128
  %v130 = vsel %vm59, %v110, 0.0
  %131 = vadd.xlane.f32.xlu0 %v130
  %v132 = vpop.xlane.xlu0 %131
  %v133 = vsel %vm59, %v111, 0.0
  %134 = vadd.xlane.f32.xlu0 %v133
  %v135 = vpop.xlane.xlu0 %134
  %v136 = vsel %vm59, %v112, 0.0
  %137 = vadd.xlane.f32.xlu0 %v136
  %v138 = vpop.xlane.xlu0 %137
  %v139 = vsel %vm59, %v113, 0.0
  %140 = vadd.xlane.f32.xlu0 %v139
  %v141 = vpop.xlane.xlu0 %140
  %v142 = vsel %vm59, %v114, 0.0
  %143 = vadd.xlane.f32.xlu0 %v142
  %v144 = vpop.xlane.xlu0 %143
  %v145 = vsel %vm59, %v115, 0.0
  %146 = vadd.xlane.f32.xlu0 %v145
  %v147 = vpop.xlane.xlu0 %146
  %v148 = vsel %vm59, %v116, 0.0
  %149 = vadd.xlane.f32.xlu0 %v148
  %v150 = vpop.xlane.xlu0 %149
  %v151 = vsel %vm59, %v117, 0.0
  %152 = vadd.xlane.f32.xlu0 %v151
  %v153 = vpop.xlane.xlu0 %152
  %v154 = vsel %vm59, %v118, 0.0
  %155 = vadd.xlane.f32.xlu0 %v154
  %v156 = vpop.xlane.xlu0 %155
  %v157 = vsel %vm59, %v119, 0.0
  %158 = vadd.xlane.f32.xlu0 %v157
  %v159 = vpop.xlane.xlu0 %158
  %v160 = vsel %vm59, %v120, 0.0
  %161 = vadd.xlane.f32.xlu0 %v160
  %v162 = vpop.xlane.xlu0 %161
  %v163 = vsel %vm59, %v121, 0.0
  %164 = vadd.xlane.f32.xlu0 %v163
  %v165 = vpop.xlane.xlu0 %164
  %v166 = vsel %vm59, %v122, 0.0
  %167 = vadd.xlane.f32.xlu0 %v166
  %v168 = vpop.xlane.xlu0 %167
  %v169 = vsel %vm59, %v123, 0.0
  %170 = vadd.xlane.f32.xlu0 %v169
  %v171 = vpop.xlane.xlu0 %170
  %v172 = vmul.f32 %v27, %v27
  %v173 = vmul.f32 %v28, %v28
  %v174 = vmul.f32 %v29, %v29
  %v175 = vmul.f32 %v30, %v30
  %v176 = vmul.f32 %v31, %v31
  %v177 = vmul.f32 %v32, %v32
  %v178 = vmul.f32 %v33, %v33
  %v179 = vmul.f32 %v34, %v34
  %v180 = vmul.f32 %v35, %v35
  %v181 = vmul.f32 %v36, %v36
  %v182 = vmul.f32 %v37, %v37
  %v183 = vmul.f32 %v38, %v38
  %v184 = vmul.f32 %v39, %v39
  %v185 = vmul.f32 %v40, %v40
  %v186 = vmul.f32 %v41, %v41
  %v187 = vmul.f32 %v42, %v42
  %v188 = vsel %vm59, %v172, 0.0
  %189 = vadd.xlane.f32.xlu0 %v188
  %v190 = vpop.xlane.xlu0 %189
  %v191 = vsel %vm59, %v173, 0.0
  %192 = vadd.xlane.f32.xlu0 %v191
  %v193 = vpop.xlane.xlu0 %192
  %v194 = vsel %vm59, %v174, 0.0
  %195 = vadd.xlane.f32.xlu0 %v194
  %v196 = vpop.xlane.xlu0 %195
  %v197 = vsel %vm59, %v175, 0.0
  %198 = vadd.xlane.f32.xlu0 %v197
  %v199 = vpop.xlane.xlu0 %198
  %v200 = vsel %vm59, %v176, 0.0
  %201 = vadd.xlane.f32.xlu0 %v200
  %v202 = vpop.xlane.xlu0 %201
  %v203 = vsel %vm59, %v177, 0.0
  %204 = vadd.xlane.f32.xlu0 %v203
  %v205 = vpop.xlane.xlu0 %204
  %v206 = vsel %vm59, %v178, 0.0
  %207 = vadd.xlane.f32.xlu0 %v206
  %v208 = vpop.xlane.xlu0 %207
  %v209 = vsel %vm59, %v179, 0.0
  %210 = vadd.xlane.f32.xlu0 %v209
  %v211 = vpop.xlane.xlu0 %210
  %v212 = vsel %vm59, %v180, 0.0
  %213 = vadd.xlane.f32.xlu0 %v212
  %v214 = vpop.xlane.xlu0 %213
  %v215 = vsel %vm59, %v181, 0.0
  %216 = vadd.xlane.f32.xlu0 %v215
  %v217 = vpop.xlane.xlu0 %216
  %v218 = vsel %vm59, %v182, 0.0
  %219 = vadd.xlane.f32.xlu0 %v218
  %v220 = vpop.xlane.xlu0 %219
  %v221 = vsel %vm59, %v183, 0.0
  %222 = vadd.xlane.f32.xlu0 %v221
  %v223 = vpop.xlane.xlu0 %222
  %v224 = vsel %vm59, %v184, 0.0
  %225 = vadd.xlane.f32.xlu0 %v224
  %v226 = vpop.xlane.xlu0 %225
  %v227 = vsel %vm59, %v185, 0.0
  %228 = vadd.xlane.f32.xlu0 %v227
  %v229 = vpop.xlane.xlu0 %228
  %v230 = vsel %vm59, %v186, 0.0
  %231 = vadd.xlane.f32.xlu0 %v230
  %v232 = vpop.xlane.xlu0 %231
  %v233 = vsel %vm59, %v187, 0.0
  %234 = vadd.xlane.f32.xlu0 %v233
  %v235 = vpop.xlane.xlu0 %234
  %v236 = vmax.f32 %v126, 1e-16
  %v237 = vmax.f32 %v129, 1e-16
  %v238 = vmax.f32 %v132, 1e-16
  %v239 = vmax.f32 %v135, 1e-16
  %v240 = vmax.f32 %v138, 1e-16
  %v241 = vmax.f32 %v141, 1e-16
  %v242 = vmax.f32 %v144, 1e-16
  %v243 = vmax.f32 %v147, 1e-16
  %v244 = vmax.f32 %v150, 1e-16
  %v245 = vmax.f32 %v153, 1e-16
  %v246 = vmax.f32 %v156, 1e-16
  %v247 = vmax.f32 %v159, 1e-16
  %v248 = vmax.f32 %v162, 1e-16
  %v249 = vmax.f32 %v165, 1e-16
  %v250 = vmax.f32 %v168, 1e-16
  %v251 = vmax.f32 %v171, 1e-16
  %v252 = vmax.f32 %v190, 1e-16
  %v253 = vmax.f32 %v193, 1e-16
  %v254 = vmax.f32 %v196, 1e-16
  %v255 = vmax.f32 %v199, 1e-16
  %v256 = vmax.f32 %v202, 1e-16
  %v257 = vmax.f32 %v205, 1e-16
  %v258 = vmax.f32 %v208, 1e-16
  %v259 = vmax.f32 %v211, 1e-16
  %v260 = vmax.f32 %v214, 1e-16
  %v261 = vmax.f32 %v217, 1e-16
  %v262 = vmax.f32 %v220, 1e-16
  %v263 = vmax.f32 %v223, 1e-16
  %v264 = vmax.f32 %v226, 1e-16
  %v265 = vmax.f32 %v229, 1e-16
  %v266 = vmax.f32 %v232, 1e-16
  %v267 = vmax.f32 %v235, 1e-16
  %v268 = vmul.f32 %v236, %v252
  %v269 = vmul.f32 %v237, %v253
  %v270 = vmul.f32 %v238, %v254
  %v271 = vmul.f32 %v239, %v255
  %v272 = vmul.f32 %v240, %v256
  %v273 = vmul.f32 %v241, %v257
  %v274 = vmul.f32 %v242, %v258
  %v275 = vmul.f32 %v243, %v259
  %v276 = vmul.f32 %v244, %v260
  %v277 = vmul.f32 %v245, %v261
  %v278 = vmul.f32 %v246, %v262
  %v279 = vmul.f32 %v247, %v263
  %v280 = vmul.f32 %v248, %v264
  %v281 = vmul.f32 %v249, %v265
  %v282 = vmul.f32 %v250, %v266
  %v283 = vmul.f32 %v251, %v267
  %v284 = vrsqrt.pop %v268
  %v285 = vmul.f32 %v284, %v268
  %v286 = vmul.f32 %v285, %v284
  %v287 = vmul.f32 0.5, %v286
  %v288 = vsub.f32 1.5, %v287
  %v289 = vmul.f32 %v284, %v288
  %vm290 = vweird.f32 %v268
  %vm291 = vweird.f32 %v284
  %vm292 = vmor %vm290, %vm291
  %v293 = vsel %vm292, %v284, %v289
  %v294 = vrsqrt.pop %v269
  %v295 = vmul.f32 %v294, %v269
  %v296 = vmul.f32 %v295, %v294
  %v297 = vmul.f32 0.5, %v296
  %v298 = vsub.f32 1.5, %v297
  %v299 = vmul.f32 %v294, %v298
  %vm300 = vweird.f32 %v269
  %vm301 = vweird.f32 %v294
  %vm302 = vmor %vm300, %vm301
  %v303 = vsel %vm302, %v294, %v299
  %v304 = vrsqrt.pop %v270
  %v305 = vmul.f32 %v304, %v270
  %v306 = vmul.f32 %v305, %v304
  %v307 = vmul.f32 0.5, %v306
  %v308 = vsub.f32 1.5, %v307
  %v309 = vmul.f32 %v304, %v308
  %vm310 = vweird.f32 %v270
  %vm311 = vweird.f32 %v304
  %vm312 = vmor %vm310, %vm311
  %v313 = vsel %vm312, %v304, %v309
  %v314 = vrsqrt.pop %v271
  %v315 = vmul.f32 %v314, %v271
  %v316 = vmul.f32 %v315, %v314
  %v317 = vmul.f32 0.5, %v316
  %v318 = vsub.f32 1.5, %v317
  %v319 = vmul.f32 %v314, %v318
  %vm320 = vweird.f32 %v271
  %vm321 = vweird.f32 %v314
  %vm322 = vmor %vm320, %vm321
  %v323 = vsel %vm322, %v314, %v319
  %v324 = vrsqrt.pop %v272
  %v325 = vmul.f32 %v324, %v272
  %v326 = vmul.f32 %v325, %v324
  %v327 = vmul.f32 0.5, %v326
  %v328 = vsub.f32 1.5, %v327
  %v329 = vmul.f32 %v324, %v328
  %vm330 = vweird.f32 %v272
  %vm331 = vweird.f32 %v324
  %vm332 = vmor %vm330, %vm331
  %v333 = vsel %vm332, %v324, %v329
  %v334 = vrsqrt.pop %v273
  %v335 = vmul.f32 %v334, %v273
  %v336 = vmul.f32 %v335, %v334
  %v337 = vmul.f32 0.5, %v336
  %v338 = vsub.f32 1.5, %v337
  %v339 = vmul.f32 %v334, %v338
  %vm340 = vweird.f32 %v273
  %vm341 = vweird.f32 %v334
  %vm342 = vmor %vm340, %vm341
  %v343 = vsel %vm342, %v334, %v339
  %v344 = vrsqrt.pop %v274
  %v345 = vmul.f32 %v344, %v274
  %v346 = vmul.f32 %v345, %v344
  %v347 = vmul.f32 0.5, %v346
  %v348 = vsub.f32 1.5, %v347
  %v349 = vmul.f32 %v344, %v348
  %vm350 = vweird.f32 %v274
  %vm351 = vweird.f32 %v344
  %vm352 = vmor %vm350, %vm351
  %v353 = vsel %vm352, %v344, %v349
  %v354 = vrsqrt.pop %v275
  %v355 = vmul.f32 %v354, %v275
  %v356 = vmul.f32 %v355, %v354
  %v357 = vmul.f32 0.5, %v356
  %v358 = vsub.f32 1.5, %v357
  %v359 = vmul.f32 %v354, %v358
  %vm360 = vweird.f32 %v275
  %vm361 = vweird.f32 %v354
  %vm362 = vmor %vm360, %vm361
  %v363 = vsel %vm362, %v354, %v359
  %v364 = vrsqrt.pop %v276
  %v365 = vmul.f32 %v364, %v276
  %v366 = vmul.f32 %v365, %v364
  %v367 = vmul.f32 0.5, %v366
  %v368 = vsub.f32 1.5, %v367
  %v369 = vmul.f32 %v364, %v368
  %vm370 = vweird.f32 %v276
  %vm371 = vweird.f32 %v364
  %vm372 = vmor %vm370, %vm371
  %v373 = vsel %vm372, %v364, %v369
  %v374 = vrsqrt.pop %v277
  %v375 = vmul.f32 %v374, %v277
  %v376 = vmul.f32 %v375, %v374
  %v377 = vmul.f32 0.5, %v376
  %v378 = vsub.f32 1.5, %v377
  %v379 = vmul.f32 %v374, %v378
  %vm380 = vweird.f32 %v277
  %vm381 = vweird.f32 %v374
  %vm382 = vmor %vm380, %vm381
  %v383 = vsel %vm382, %v374, %v379
  %v384 = vrsqrt.pop %v278
  %v385 = vmul.f32 %v384, %v278
  %v386 = vmul.f32 %v385, %v384
  %v387 = vmul.f32 0.5, %v386
  %v388 = vsub.f32 1.5, %v387
  %v389 = vmul.f32 %v384, %v388
  %vm390 = vweird.f32 %v278
  %vm391 = vweird.f32 %v384
  %vm392 = vmor %vm390, %vm391
  %v393 = vsel %vm392, %v384, %v389
  %v394 = vrsqrt.pop %v279
  %v395 = vmul.f32 %v394, %v279
  %v396 = vmul.f32 %v395, %v394
  %v397 = vmul.f32 0.5, %v396
  %v398 = vsub.f32 1.5, %v397
  %v399 = vmul.f32 %v394, %v398
  %vm400 = vweird.f32 %v279
  %vm401 = vweird.f32 %v394
  %vm402 = vmor %vm400, %vm401
  %v403 = vsel %vm402, %v394, %v399
  %v404 = vrsqrt.pop %v280
  %v405 = vmul.f32 %v404, %v280
  %v406 = vmul.f32 %v405, %v404
  %v407 = vmul.f32 0.5, %v406
  %v408 = vsub.f32 1.5, %v407
  %v409 = vmul.f32 %v404, %v408
  %vm410 = vweird.f32 %v280
  %vm411 = vweird.f32 %v404
  %vm412 = vmor %vm410, %vm411
  %v413 = vsel %vm412, %v404, %v409
  %v414 = vrsqrt.pop %v281
  %v415 = vmul.f32 %v414, %v281
  %v416 = vmul.f32 %v415, %v414
  %v417 = vmul.f32 0.5, %v416
  %v418 = vsub.f32 1.5, %v417
  %v419 = vmul.f32 %v414, %v418
  %vm420 = vweird.f32 %v281
  %vm421 = vweird.f32 %v414
  %vm422 = vmor %vm420, %vm421
  %v423 = vsel %vm422, %v414, %v419
  %v424 = vrsqrt.pop %v282
  %v425 = vmul.f32 %v424, %v282
  %v426 = vmul.f32 %v425, %v424
  %v427 = vmul.f32 0.5, %v426
  %v428 = vsub.f32 1.5, %v427
  %v429 = vmul.f32 %v424, %v428
  %vm430 = vweird.f32 %v282
  %vm431 = vweird.f32 %v424
  %vm432 = vmor %vm430, %vm431
  %v433 = vsel %vm432, %v424, %v429
  %v434 = vrsqrt.pop %v283
  %v435 = vmul.f32 %v434, %v283
  %v436 = vmul.f32 %v435, %v434
  %v437 = vmul.f32 0.5, %v436
  %v438 = vsub.f32 1.5, %v437
  %v439 = vmul.f32 %v434, %v438
  %vm440 = vweird.f32 %v283
  %vm441 = vweird.f32 %v434
  %vm442 = vmor %vm440, %vm441
  %v443 = vsel %vm442, %v434, %v439
  %v444 = vmul.f32 %v62, %v293
  %v445 = vmul.f32 %v65, %v303
  %v446 = vmul.f32 %v68, %v313
  %v447 = vmul.f32 %v71, %v323
  %v448 = vmul.f32 %v74, %v333
  %v449 = vmul.f32 %v77, %v343
  %v450 = vmul.f32 %v80, %v353
  %v451 = vmul.f32 %v83, %v363
  %v452 = vmul.f32 %v86, %v373
  %v453 = vmul.f32 %v89, %v383
  %v454 = vmul.f32 %v92, %v393
  %v455 = vmul.f32 %v95, %v403
  %v456 = vmul.f32 %v98, %v413
  %v457 = vmul.f32 %v101, %v423
  %v458 = vmul.f32 %v104, %v433
  %v459 = vmul.f32 %v107, %v443
  %v460 = vsub.f32 1.0, %v444
  %v461 = vsub.f32 1.0, %v445
  %v462 = vsub.f32 1.0, %v446
  %v463 = vsub.f32 1.0, %v447
  %v464 = vsub.f32 1.0, %v448
  %v465 = vsub.f32 1.0, %v449
  %v466 = vsub.f32 1.0, %v450
  %v467 = vsub.f32 1.0, %v451
  %v468 = vsub.f32 1.0, %v452
  %v469 = vsub.f32 1.0, %v453
  %v470 = vsub.f32 1.0, %v454
  %v471 = vsub.f32 1.0, %v455
  %v472 = vsub.f32 1.0, %v456
  %v473 = vsub.f32 1.0, %v457
  %v474 = vsub.f32 1.0, %v458
  %v475 = vsub.f32 1.0, %v459
  %vm476 = vcmask 7168
  %477 = vst.msk [vmem:[%s2] sm:$0xff] %vm476, %v460
  %478 = vst.msk [vmem:[%s2 + $0x8] sm:$0xff] %vm476, %v461
  %479 = vst.msk [vmem:[%s2 + $0x10] sm:$0xff] %vm476, %v462
  %480 = vst.msk [vmem:[%s2 + $0x18] sm:$0xff] %vm476, %v463
  %481 = vst.msk [vmem:[%s2 + $0x20] sm:$0xff] %vm476, %v464
  %482 = vst.msk [vmem:[%s2 + $0x28] sm:$0xff] %vm476, %v465
  %483 = vst.msk [vmem:[%s2 + $0x30] sm:$0xff] %vm476, %v466
  %484 = vst.msk [vmem:[%s2 + $0x38] sm:$0xff] %vm476, %v467
  %485 = vst.msk [vmem:[%s2 + $0x40] sm:$0xff] %vm476, %v468
  %486 = vst.msk [vmem:[%s2 + $0x48] sm:$0xff] %vm476, %v469
  %487 = vst.msk [vmem:[%s2 + $0x50] sm:$0xff] %vm476, %v470
  %488 = vst.msk [vmem:[%s2 + $0x58] sm:$0xff] %vm476, %v471
  %489 = vst.msk [vmem:[%s2 + $0x60] sm:$0xff] %vm476, %v472
  %490 = vst.msk [vmem:[%s2 + $0x68] sm:$0xff] %vm476, %v473
  %491 = vst.msk [vmem:[%s2 + $0x70] sm:$0xff] %vm476, %v474
  %492 = vst.msk [vmem:[%s2 + $0x78] sm:$0xff] %vm476, %v475
  // Predicated region
  $region10: #{tpu_custom_call.1} parent=0 // pred_check
    _
  $region11: #{tpu_custom_call.1} parent=0 // pred_check_branch
    %494 = sbr.rel (0) target = $region13
  $region12: #{tpu_custom_call.1} parent=0 // pred_region
    _
  $region13: #{tpu_custom_call.1} parent=0 // pred_fallthru
    _
  // Predicated region
  $region14: #{tpu_custom_call.1} parent=0 // pred_check
    _
  $region15: #{tpu_custom_call.1} parent=0 // pred_check_branch
    %496 = sbr.rel (0) target = $region17
  $region16: #{tpu_custom_call.1} parent=0 // pred_region
    _
  $region17: #{tpu_custom_call.1} parent=0 // pred_fallthru
    _

</llo_original>
